<compile_context>
chip_gen: v7x
topology: tpu7x:2x2x1
jax: 0.10.0
libtpu: 0.0.40
codegen_flags: <defaults>
</compile_context>

<pallas_src>
import functools

import jax
import jax.numpy as jnp
from jax.experimental import pallas as pl
from jax.experimental.pallas import tpu as pltpu

_LANE = 128
_SUBLANE = 8

# Single-buffering of the resident parameter blocks is an optimization; fall
# back gracefully on jax versions that don't support pipeline_mode/Buffered.
try:
    _PARAM_PIPELINE_MODE = [pl.Buffered(buffer_count=1)]
except Exception:  # pl.Buffered missing or rejects buffer_count=1
    _PARAM_PIPELINE_MODE = [None]


def _round_up(n, m):
    return ((n + m - 1) // m) * m


def _resblock_kernel(x_ref, w1_ref, b1_ref, w2_ref, b2_ref, alpha_ref,
                     *rest, use_layernorm: bool, eps: float, ln_dim: int):
    if use_layernorm:
        g_ref, beta_ref, o_ref = rest
    else:
        (o_ref,) = rest

    x = x_ref[...]                                          # (tb, D_pad)

    # linear1 on the MXU: bf16 (or f32) operands, f32 accumulation.
    h = jnp.dot(x.astype(w1_ref.dtype), w1_ref[...],
                preferred_element_type=jnp.float32)
    h = h + b1_ref[...]                                     # f32 (1, H_pad)

    # PReLU with a single learnable slope (PyTorch default num_parameters=1).
    a = alpha_ref[0]
    h = jnp.where(h >= 0.0, h, a * h)

    # linear2: cast back to the weight compute dtype, accumulate f32.
    y = jnp.dot(h.astype(w2_ref.dtype), w2_ref[...],
                preferred_element_type=jnp.float32)
    y = y + b2_ref[...]                                     # f32 (1, D_pad)

    if use_layernorm:
        # Padded feature columns of y are exactly 0, so lane-dim sums equal
        # sums over the true `ln_dim` columns; divide by ln_dim, not D_pad.
        inv_d = 1.0 / float(ln_dim)
        mu = jnp.sum(y, axis=-1, keepdims=True) * inv_d
        ex2 = jnp.sum(y * y, axis=-1, keepdims=True) * inv_d
        var = ex2 - mu * mu                                 # E[y^2] - mu^2
        y = (y - mu) * jax.lax.rsqrt(var + eps)
        y = y * g_ref[...] + beta_ref[...]                  # padded affine = 0

    # Residual add in f32, cast to output dtype (lane-dense store: D_pad%128==0).
    o_ref[...] = (y + x.astype(jnp.float32)).astype(o_ref.dtype)


def prepare_params(params, compute_dtype=jnp.bfloat16):
    """One-time parameter prep (do at load time, NOT per forward call):
    transpose PyTorch (out,in) weights, pad D/H to lane multiples (128), cast
    matmul operands to `compute_dtype` (bf16 default -> MXU-native).  Biases
    and LayerNorm affine stay f32 (applied after f32 accumulation)."""
    w1 = jnp.asarray(params["w1"], jnp.float32)             # (H, D)
    w2 = jnp.asarray(params["w2"], jnp.float32)             # (D, H)
    H, D = w1.shape
    Dp, Hp = _round_up(D, _LANE), _round_up(H, _LANE)

    def pad2(a, r, c):
        return jnp.pad(a, ((0, r - a.shape[0]), (0, c - a.shape[1])))

    return {
        "dim": D, "hidden": H, "dim_pad": Dp, "hidden_pad": Hp,
        "w1t": pad2(w1.T, Dp, Hp).astype(compute_dtype),    # (Dp, Hp)
        "b1": pad2(jnp.asarray(params["b1"], jnp.float32).reshape(1, H), 1, Hp),
        "w2t": pad2(w2.T, Hp, Dp).astype(compute_dtype),    # (Hp, Dp)
        "b2": pad2(jnp.asarray(params["b2"], jnp.float32).reshape(1, D), 1, Dp),
        "alpha": jnp.asarray(params["alpha"], jnp.float32).reshape(1),
        # Pad gamma/beta with ZEROS so padded output columns stay exactly 0.
        "gamma": pad2(jnp.asarray(params["gamma"], jnp.float32).reshape(1, D), 1, Dp),
        "beta": pad2(jnp.asarray(params["beta"], jnp.float32).reshape(1, D), 1, Dp),
    }


def _vmem_limit_bytes():
    """Generation-aware VMEM budget (~80% of capacity: ~51 MiB on v7x,
    ~102 MiB on v5e/v6e).  Returns None (Mosaic default) if unavailable."""
    try:
        cap = getattr(pltpu.get_tpu_info(), "vmem_capacity_bytes", None)
        if cap:
            return int(cap * 0.8)
    except Exception:
        pass
    return None


def resblock_forward(x, prep, *, use_layernorm=False, eps=1e-5, tile_b=256):
    """x: (B, dim). prep: output of prepare_params."""
    B, D = x.shape
    assert D == prep["dim"], "feature dim mismatch with prepared params"
    Dp, Hp = prep["dim_pad"], prep["hidden_pad"]

    # Lane-dense feature dim: pad x's features once iff dim % 128 != 0
    # (weights/biases/affine were already padded in prepare_params).
    x_in = jnp.pad(x, ((0, 0), (0, Dp - D))) if Dp != D else x

    # Batch tile: multiple of 8 sublanes, large enough to fill the 256-wide
    # MXU on v6e/v7x.  No batch padding: Pallas masks the ragged last block.
    tb = min(tile_b, _round_up(B, _SUBLANE))
    grid = (pl.cdiv(B, tb),)

    args = [x_in, prep["w1t"], prep["b1"], prep["w2t"], prep["b2"],
            prep["alpha"]]
    if use_layernorm:
        args += [prep["gamma"], prep["beta"]]

    kernel = functools.partial(_resblock_kernel, use_layernorm=use_layernorm,
                               eps=eps, ln_dim=D)

    cp_kwargs = dict(dimension_semantics=("parallel",))
    vmem_limit = _vmem_limit_bytes()
    if vmem_limit is not None:
        cp_kwargs["vmem_limit_bytes"] = vmem_limit

    def build_and_run(param_mode):
        def resident(shape):
            # Constant index_map -> DMA'd into VMEM once; single-buffered when
            # supported (a constant block gains nothing from double buffering).
            if param_mode is not None:
                return pl.BlockSpec(shape, lambda i: (0, 0),
                                    pipeline_mode=param_mode)
            return pl.BlockSpec(shape, lambda i: (0, 0))

        in_specs = [
            pl.BlockSpec((tb, Dp), lambda i: (i, 0)),             # x tile
            resident((Dp, Hp)),                                    # W1^T
            resident((1, Hp)),                                     # b1
            resident((Hp, Dp)),                                    # W2^T
            resident((1, Dp)),                                     # b2
            pl.BlockSpec(memory_space=pltpu.MemorySpace.SMEM),     # alpha
        ]
        if use_layernorm:
            in_specs += [resident((1, Dp)), resident((1, Dp))]     # gamma, beta

        return pl.pallas_call(
            kernel,
            out_shape=jax.ShapeDtypeStruct((B, Dp), x.dtype),
            grid=grid,
            in_specs=in_specs,
            out_specs=pl.BlockSpec((tb, Dp), lambda i: (i, 0)),
            compiler_params=pltpu.CompilerParams(**cp_kwargs),
        )(*args)

    if _PARAM_PIPELINE_MODE[0] is not None:
        try:
            out = build_and_run(_PARAM_PIPELINE_MODE[0])
        except Exception:
            # pipeline_mode / Buffered(1) unsupported on this jax: remember and
            # fall back to default (double-buffered) resident params.
            _PARAM_PIPELINE_MODE[0] = None
            out = build_and_run(None)
    else:
        out = build_and_run(None)

    return out[:, :D] if Dp != D else out


def init_params(key, dim, hidden_dim):
    k1, k2, k3, k4 = jax.random.split(key, 4)
    bound1 = 1.0 / jnp.sqrt(dim)
    bound2 = 1.0 / jnp.sqrt(hidden_dim)
    return {
        "w1": jax.random.uniform(k1, (hidden_dim, dim), jnp.float32, -bound1, bound1),
        "b1": jax.random.uniform(k2, (hidden_dim,), jnp.float32, -bound1, bound1),
        "w2": jax.random.uniform(k3, (dim, hidden_dim), jnp.float32, -bound2, bound2),
        "b2": jax.random.uniform(k4, (dim,), jnp.float32, -bound2, bound2),
        "alpha": jnp.asarray([0.25], jnp.float32),   # nn.PReLU default slope
        "gamma": jnp.ones((dim,), jnp.float32),      # nn.LayerNorm affine
        "beta": jnp.zeros((dim,), jnp.float32),
    }


def resblock_ref(x, p, *, use_layernorm=False, eps=1e-5):
    h = x @ p["w1"].T + p["b1"]
    h = jnp.where(h >= 0, h, p["alpha"][0] * h)
    y = h @ p["w2"].T + p["b2"]
    if use_layernorm:
        mu = jnp.mean(y, -1, keepdims=True)
        var = jnp.mean((y - mu) ** 2, -1, keepdims=True)
        y = (y - mu) / jnp.sqrt(var + eps) * p["gamma"] + p["beta"]
    return y + x


if __name__ == "__main__":
    key = jax.random.PRNGKey(0)
    kx, kp, kx2, kp2 = jax.random.split(key, 4)

    # --- Small shapes consistent with the module; f32 weights -> exact check
    # (also exercises the D=32/H=64 -> 128 lane-padding path).
    B, dim, hidden = 8, 32, 64
    x = jax.random.normal(kx, (B, dim), jnp.float32)
    params = init_params(kp, dim, hidden)
    prep_f32 = prepare_params(params, compute_dtype=jnp.float32)

    out = resblock_forward(x, prep_f32, use_layernorm=False)
    jax.block_until_ready(out)
    ref = resblock_ref(x, params, use_layernorm=False)
    assert jnp.allclose(out, ref, atol=1e-5, rtol=1e-5), "mismatch (no LN)"

    out_ln = resblock_forward(x, prep_f32, use_layernorm=True)
    jax.block_until_ready(out_ln)
    ref_ln = resblock_ref(x, params, use_layernorm=True)
    assert jnp.allclose(out_ln, ref_ln, atol=1e-4, rtol=1e-4), "mismatch (LN)"

    # --- Default bf16 matmul operands, lane-aligned D/H, multi-tile grid with
    # a ragged last batch block (no host-side batch padding).
    B2, dim2, hidden2 = 130, 128, 256
    x2 = jax.random.normal(kx2, (B2, dim2), jnp.float32)
    params2 = init_params(kp2, dim2, hidden2)
    prep_bf16 = prepare_params(params2)            # compute_dtype=bf16 default
    out2 = resblock_forward(x2, prep_bf16, use_layernorm=True, tile_b=64)
    jax.block_until_ready(out2)
    ref2 = resblock_ref(x2, params2, use_layernorm=True)
    assert jnp.allclose(out2, ref2, atol=5e-2, rtol=5e-2), "mismatch (bf16 tiled)"

    print("KERNEL_OK")
</pallas_src>

<mosaic_0001>
module attributes {stable_mosaic.version = 11 : i64} {
  func.func @_resblock_kernel(%arg0: i32, %arg1: memref<8x128xf32, #tpu.memory_space<vmem>>, %arg2: memref<128x128xf32, #tpu.memory_space<vmem>>, %arg3: memref<1x128xf32, #tpu.memory_space<vmem>>, %arg4: memref<128x128xf32, #tpu.memory_space<vmem>>, %arg5: memref<1x128xf32, #tpu.memory_space<vmem>>, %arg6: memref<1xf32, #tpu.memory_space<smem>>, %arg7: memref<8x128xf32, #tpu.memory_space<vmem>>) attributes {dimension_semantics = [#tpu.dimension_semantics<parallel>], iteration_bounds = array<i64: 1>, scalar_prefetch = 0 : i64, scratch_operands = 0 : i64, tpu.core_type = #tpu.core_type<tc>, window_params = [{transform_indices = @transform_0, window_bounds = array<i64: 8, 128>}, {pipeline_mode = #tpu.pipeline_mode<synchronous>, transform_indices = @transform_1, window_bounds = array<i64: 128, 128>}, {pipeline_mode = #tpu.pipeline_mode<synchronous>, transform_indices = @transform_2, window_bounds = array<i64: 1, 128>}, {pipeline_mode = #tpu.pipeline_mode<synchronous>, transform_indices = @transform_3, window_bounds = array<i64: 128, 128>}, {pipeline_mode = #tpu.pipeline_mode<synchronous>, transform_indices = @transform_4, window_bounds = array<i64: 1, 128>}, {transform_indices = @transform_5, window_bounds = array<i64: 1>}, {transform_indices = @transform_6, window_bounds = array<i64: 8, 128>}]} {
    %c0 = arith.constant 0 : index
    %c0_0 = arith.constant 0 : index
    %0 = vector.load %arg1[%c0, %c0_0] : memref<8x128xf32, #tpu.memory_space<vmem>>, vector<8x128xf32>
    %c0_1 = arith.constant 0 : index
    %c0_2 = arith.constant 0 : index
    %1 = vector.load %arg2[%c0_1, %c0_2] : memref<128x128xf32, #tpu.memory_space<vmem>>, vector<128x128xf32>
    %cst = arith.constant dense<0.000000e+00> : vector<8x128xf32>
    %2 = tpu.matmul %0, %1, %cst {dimension_numbers = #tpu.dot_dimension_numbers<[1], [0], [0], [1], [0, 0, 1, 1], [], []>} : vector<8x128xf32>, vector<128x128xf32>, vector<8x128xf32> -> vector<8x128xf32>
    %c0_3 = arith.constant 0 : index
    %c0_4 = arith.constant 0 : index
    %3 = vector.load %arg3[%c0_3, %c0_4] : memref<1x128xf32, #tpu.memory_space<vmem>>, vector<1x128xf32>
    %4 = vector.broadcast %3 : vector<1x128xf32> to vector<8x128xf32>
    %5 = arith.addf %2, %4 : vector<8x128xf32>
    %c0_5 = arith.constant 0 : index
    %6 = memref.load %arg6[%c0_5] : memref<1xf32, #tpu.memory_space<smem>>
    %cst_6 = arith.constant 0.000000e+00 : f32
    %7 = vector.broadcast %cst_6 : f32 to vector<8x128xf32>
    %8 = arith.cmpf oge, %5, %7 : vector<8x128xf32>
    %9 = vector.broadcast %6 : f32 to vector<8x128xf32>
    %10 = arith.mulf %9, %5 : vector<8x128xf32>
    %11 = arith.select %8, %5, %10 : vector<8x128xi1>, vector<8x128xf32>
    %c0_7 = arith.constant 0 : index
    %c0_8 = arith.constant 0 : index
    %12 = vector.load %arg4[%c0_7, %c0_8] : memref<128x128xf32, #tpu.memory_space<vmem>>, vector<128x128xf32>
    %cst_9 = arith.constant dense<0.000000e+00> : vector<8x128xf32>
    %13 = tpu.matmul %11, %12, %cst_9 {dimension_numbers = #tpu.dot_dimension_numbers<[1], [0], [0], [1], [0, 0, 1, 1], [], []>} : vector<8x128xf32>, vector<128x128xf32>, vector<8x128xf32> -> vector<8x128xf32>
    %c0_10 = arith.constant 0 : index
    %c0_11 = arith.constant 0 : index
    %14 = vector.load %arg5[%c0_10, %c0_11] : memref<1x128xf32, #tpu.memory_space<vmem>>, vector<1x128xf32>
    %15 = vector.broadcast %14 : vector<1x128xf32> to vector<8x128xf32>
    %16 = arith.addf %13, %15 : vector<8x128xf32>
    %17 = arith.addf %16, %0 : vector<8x128xf32>
    %c0_12 = arith.constant 0 : index
    %c0_13 = arith.constant 0 : index
    %18 = vector.load %arg7[%c0_12, %c0_13] : memref<8x128xf32, #tpu.memory_space<vmem>>, vector<8x128xf32>
    tpu.vector_store %arg7[%c0_12, %c0_13], %17 {strides = array<i32>} : memref<8x128xf32, #tpu.memory_space<vmem>>, vector<8x128xf32>,
    return
  }
  func.func @transform_0(%arg0: i32) -> (i32, i32) {
    %c0_i32 = arith.constant 0 : i32
    %c0_i32_0 = arith.constant 0 : i32
    return %arg0, %c0_i32 : i32, i32
  }
  func.func @transform_1(%arg0: i32) -> (i32, i32) {
    %c0_i32 = arith.constant 0 : i32
    %c0_i32_0 = arith.constant 0 : i32
    %c0_i32_1 = arith.constant 0 : i32
    return %c0_i32, %c0_i32_0 : i32, i32
  }
  func.func @transform_2(%arg0: i32) -> (i32, i32) {
    %c0_i32 = arith.constant 0 : i32
    %c0_i32_0 = arith.constant 0 : i32
    %c0_i32_1 = arith.constant 0 : i32
    return %c0_i32, %c0_i32_0 : i32, i32
  }
  func.func @transform_3(%arg0: i32) -> (i32, i32) {
    %c0_i32 = arith.constant 0 : i32
    %c0_i32_0 = arith.constant 0 : i32
    %c0_i32_1 = arith.constant 0 : i32
    return %c0_i32, %c0_i32_0 : i32, i32
  }
  func.func @transform_4(%arg0: i32) -> (i32, i32) {
    %c0_i32 = arith.constant 0 : i32
    %c0_i32_0 = arith.constant 0 : i32
    %c0_i32_1 = arith.constant 0 : i32
    return %c0_i32, %c0_i32_0 : i32, i32
  }
  func.func @transform_5(%arg0: i32) -> i32 {
    %c0_i32 = arith.constant 0 : i32
    %c0_i32_0 = arith.constant 0 : i32
    return %c0_i32 : i32
  }
  func.func @transform_6(%arg0: i32) -> (i32, i32) {
    %c0_i32 = arith.constant 0 : i32
    %c0_i32_0 = arith.constant 0 : i32
    return %arg0, %c0_i32 : i32, i32
  }
}

module attributes {stable_mosaic.version = 11 : i64} {
  func.func @_resblock_kernel(%arg0: i32, %arg1: memref<8x128xf32, #tpu.memory_space<vmem>>, %arg2: memref<128x128xf32, #tpu.memory_space<vmem>>, %arg3: memref<1x128xf32, #tpu.memory_space<vmem>>, %arg4: memref<128x128xf32, #tpu.memory_space<vmem>>, %arg5: memref<1x128xf32, #tpu.memory_space<vmem>>, %arg6: memref<1xf32, #tpu.memory_space<smem>>, %arg7: memref<8x128xf32, #tpu.memory_space<vmem>>) attributes {dimension_semantics = [#tpu.dimension_semantics<parallel>], iteration_bounds = array<i64: 1>, scalar_prefetch = 0 : i64, scratch_operands = 0 : i64, tpu.core_type = #tpu.core_type<tc>, window_params = [{transform_indices = @transform_0, window_bounds = array<i64: 8, 128>}, {pipeline_mode = #tpu.pipeline_mode<synchronous>, transform_indices = @transform_1, window_bounds = array<i64: 128, 128>}, {pipeline_mode = #tpu.pipeline_mode<synchronous>, transform_indices = @transform_2, window_bounds = array<i64: 1, 128>}, {pipeline_mode = #tpu.pipeline_mode<synchronous>, transform_indices = @transform_3, window_bounds = array<i64: 128, 128>}, {pipeline_mode = #tpu.pipeline_mode<synchronous>, transform_indices = @transform_4, window_bounds = array<i64: 1, 128>}, {transform_indices = @transform_5, window_bounds = array<i64: 1>}, {transform_indices = @transform_6, window_bounds = array<i64: 8, 128>}]} {
    %c0 = arith.constant 0 : index
    %c0_0 = arith.constant 0 : index
    %0 = vector.load %arg1[%c0, %c0_0] : memref<8x128xf32, #tpu.memory_space<vmem>>, vector<8x128xf32>
    %c0_1 = arith.constant 0 : index
    %c0_2 = arith.constant 0 : index
    %1 = vector.load %arg2[%c0_1, %c0_2] : memref<128x128xf32, #tpu.memory_space<vmem>>, vector<128x128xf32>
    %cst = arith.constant dense<0.000000e+00> : vector<8x128xf32>
    %2 = tpu.matmul %0, %1, %cst {dimension_numbers = #tpu.dot_dimension_numbers<[1], [0], [0], [1], [0, 0, 1, 1], [], []>} : vector<8x128xf32>, vector<128x128xf32>, vector<8x128xf32> -> vector<8x128xf32>
    %c0_3 = arith.constant 0 : index
    %c0_4 = arith.constant 0 : index
    %3 = vector.load %arg3[%c0_3, %c0_4] : memref<1x128xf32, #tpu.memory_space<vmem>>, vector<1x128xf32>
    %4 = vector.broadcast %3 : vector<1x128xf32> to vector<8x128xf32>
    %5 = arith.addf %2, %4 : vector<8x128xf32>
    %c0_5 = arith.constant 0 : index
    %6 = memref.load %arg6[%c0_5] : memref<1xf32, #tpu.memory_space<smem>>
    %cst_6 = arith.constant 0.000000e+00 : f32
    %7 = vector.broadcast %cst_6 : f32 to vector<8x128xf32>
    %8 = arith.cmpf oge, %5, %7 : vector<8x128xf32>
    %9 = vector.broadcast %6 : f32 to vector<8x128xf32>
    %10 = arith.mulf %9, %5 : vector<8x128xf32>
    %11 = arith.select %8, %5, %10 : vector<8x128xi1>, vector<8x128xf32>
    %c0_7 = arith.constant 0 : index
    %c0_8 = arith.constant 0 : index
    %12 = vector.load %arg4[%c0_7, %c0_8] : memref<128x128xf32, #tpu.memory_space<vmem>>, vector<128x128xf32>
    %cst_9 = arith.constant dense<0.000000e+00> : vector<8x128xf32>
    %13 = tpu.matmul %11, %12, %cst_9 {dimension_numbers = #tpu.dot_dimension_numbers<[1], [0], [0], [1], [0, 0, 1, 1], [], []>} : vector<8x128xf32>, vector<128x128xf32>, vector<8x128xf32> -> vector<8x128xf32>
    %c0_10 = arith.constant 0 : index
    %c0_11 = arith.constant 0 : index
    %14 = vector.load %arg5[%c0_10, %c0_11] : memref<1x128xf32, #tpu.memory_space<vmem>>, vector<1x128xf32>
    %15 = vector.broadcast %14 : vector<1x128xf32> to vector<8x128xf32>
    %16 = arith.addf %13, %15 : vector<8x128xf32>
    %17 = arith.addf %16, %0 : vector<8x128xf32>
    %c0_12 = arith.constant 0 : index
    %c0_13 = arith.constant 0 : index
    %18 = vector.load %arg7[%c0_12, %c0_13] : memref<8x128xf32, #tpu.memory_space<vmem>>, vector<8x128xf32>
    tpu.vector_store %arg7[%c0_12, %c0_13], %17 {strides = array<i32>} : memref<8x128xf32, #tpu.memory_space<vmem>>, vector<8x128xf32>,
    return
  }
  func.func @transform_0(%arg0: i32) -> (i32, i32) {
    %c0_i32 = arith.constant 0 : i32
    %c0_i32_0 = arith.constant 0 : i32
    return %arg0, %c0_i32 : i32, i32
  }
  func.func @transform_1(%arg0: i32) -> (i32, i32) {
    %c0_i32 = arith.constant 0 : i32
    %c0_i32_0 = arith.constant 0 : i32
    %c0_i32_1 = arith.constant 0 : i32
    return %c0_i32, %c0_i32_0 : i32, i32
  }
  func.func @transform_2(%arg0: i32) -> (i32, i32) {
    %c0_i32 = arith.constant 0 : i32
    %c0_i32_0 = arith.constant 0 : i32
    %c0_i32_1 = arith.constant 0 : i32
    return %c0_i32, %c0_i32_0 : i32, i32
  }
  func.func @transform_3(%arg0: i32) -> (i32, i32) {
    %c0_i32 = arith.constant 0 : i32
    %c0_i32_0 = arith.constant 0 : i32
    %c0_i32_1 = arith.constant 0 : i32
    return %c0_i32, %c0_i32_0 : i32, i32
  }
  func.func @transform_4(%arg0: i32) -> (i32, i32) {
    %c0_i32 = arith.constant 0 : i32
    %c0_i32_0 = arith.constant 0 : i32
    %c0_i32_1 = arith.constant 0 : i32
    return %c0_i32, %c0_i32_0 : i32, i32
  }
  func.func @transform_5(%arg0: i32) -> i32 {
    %c0_i32 = arith.constant 0 : i32
    %c0_i32_0 = arith.constant 0 : i32
    return %c0_i32 : i32
  }
  func.func @transform_6(%arg0: i32) -> (i32, i32) {
    %c0_i32 = arith.constant 0 : i32
    %c0_i32_0 = arith.constant 0 : i32
    return %arg0, %c0_i32 : i32, i32
  }
}

</mosaic_0001>

<llo_original>
// kernel: tpu_custom_call.1
$region0: #{tpu_custom_call.1}
  #allocation0 [shape = 'u32[]', space=smem, size = 0x4, offset = 0x4, fixed_abs, tag = 'smem constant byte address 0x4 - core index']
  #allocation1 [shape = 'u32[144,128]{1,0:T(1,128)}', space=vmem, size = 0x12000, scoped, tag = 'internal scratch']
  #allocation2 [shape = 'f32[1]{0:T(128)S(6)}', space=smem, size = 0x200, scoped, tag = 'scoped memory for tpu_custom_call.1']
  %s0 = inlined_call_operand.hbm [shape: f32[8,128], index: 0, kind: input, shape index: {}]
  %s1 = inlined_call_operand.hbm [shape: f32[128,128], index: 1, kind: input, shape index: {}]
  %s2 = inlined_call_operand.vmem [shape: f32[1,128], index: 2, kind: input, shape index: {}]
  %s3 = inlined_call_operand.hbm [shape: f32[128,128], index: 3, kind: input, shape index: {}]
  %s4 = inlined_call_operand.vmem [shape: f32[1,128], index: 4, kind: input, shape index: {}]
  %s5 = inlined_call_operand.<no memory space> [shape: f32[1], index: 5, kind: input, shape index: {}]
  %s6 = inlined_call_operand.hbm [shape: f32[8,128], index: 6, kind: output, shape index: {}]
  %s7 = sld [smem:[#allocation0]]
  $region46: #{tpu_custom_call.1} parent=0
    _
  %s9 = ssub.s32 1, %s7
  %s10 = scalar_select 0, %s9, %s7
  %11 = sst [smem:[#allocation2]] %s5
  $region1: #{tpu_custom_call.1} parent=0
    #allocation3 [shape = 'u8[4096]{0}', space=vmem, size = 0x1000, scoped, tag = 'input window, operand 0, single buffered']
    #allocation4 [shape = 's32[1]{0}', space=sflag, size = 0x4, scoped, tag = 'scoped memory for tpu_custom_call.1']
    #allocation5 [shape = 's32[1]{0}', space=sflag, size = 0x4, scoped, tag = 'scoped memory for tpu_custom_call.1']
    #allocation6 [shape = 'u8[65536]{0}', space=vmem, size = 0x10000, scoped, tag = 'input window, operand 1, single buffered']
    #allocation7 [shape = 's32[1]{0}', space=sflag, size = 0x4, scoped, tag = 'scoped memory for tpu_custom_call.1']
    #allocation8 [shape = 'u8[65536]{0}', space=vmem, size = 0x10000, scoped, tag = 'input window, operand 3, single buffered']
    #allocation9 [shape = 'u8[4096]{0}', space=vmem, size = 0x1000, scoped, tag = 'output window, operand 0, single buffered']
    %12 = vsyncpa [#allocation4], 0
    %13 = vsyncpa [#allocation7], 0
    %14 = vsyncpa [#allocation5], 0
    // Predicated region
    $region2: #{tpu_custom_call.1} parent=1 // pred_check
      _
    $region3: #{tpu_custom_call.1} parent=1 // pred_check_branch
      %16 = sbr.rel (0) target = $region5
    $region4: #{tpu_custom_call.1} parent=1 // pred_region
      %s18 = ssub.s32 128, 128
      %19 = vsyncadd [#allocation4], %s18
      %s21 = sshll.u32 [#allocation3], 4
      %s22 = int_to_ptr.vmem [resolvable:$true] %s21
      %24 = dma.hbm_to_vmem [thread:$0]  %s0, 128, %s22, [#allocation4]
    $region5: #{tpu_custom_call.1} parent=1 // pred_fallthru
      _
    // Predicated region
    $region6: #{tpu_custom_call.1} parent=1 // pred_check
      _
    $region7: #{tpu_custom_call.1} parent=1 // pred_check_branch
      %26 = sbr.rel (0) target = $region9
    $region8: #{tpu_custom_call.1} parent=1 // pred_region
      %s28 = ssub.s32 2048, 2048
      %29 = vsyncadd [#allocation7], %s28
      %s30 = sshll.u32 [#allocation6], 4
      %s31 = int_to_ptr.vmem [resolvable:$true] %s30
      %36 = dma.hbm_to_vmem [thread:$0]  %s1, 2048, %s31, [#allocation7], 128, 128, 8
    $region9: #{tpu_custom_call.1} parent=1 // pred_fallthru
      _
    // Predicated region
    $region10: #{tpu_custom_call.1} parent=1 // pred_check
      _
    $region11: #{tpu_custom_call.1} parent=1 // pred_check_branch
      %38 = sbr.rel (0) target = $region13
    $region12: #{tpu_custom_call.1} parent=1 // pred_region
      _
    $region13: #{tpu_custom_call.1} parent=1 // pred_fallthru
      _
    // Predicated region
    $region14: #{tpu_custom_call.1} parent=1 // pred_check
      _
    $region15: #{tpu_custom_call.1} parent=1 // pred_check_branch
      %40 = sbr.rel (0) target = $region17
    $region16: #{tpu_custom_call.1} parent=1 // pred_region
      %s42 = ssub.s32 2048, 2048
      %43 = vsyncadd [#allocation7], %s42
      %s44 = sshll.u32 [#allocation8], 4
      %s45 = int_to_ptr.vmem [resolvable:$true] %s44
      %50 = dma.hbm_to_vmem [thread:$0]  %s3, 2048, %s45, [#allocation7], 128, 128, 8
    $region17: #{tpu_custom_call.1} parent=1 // pred_fallthru
      _
    // Predicated region
    $region18: #{tpu_custom_call.1} parent=1 // pred_check
      _
    $region19: #{tpu_custom_call.1} parent=1 // pred_check_branch
      %52 = sbr.rel (0) target = $region21
    $region20: #{tpu_custom_call.1} parent=1 // pred_region
      _
    $region21: #{tpu_custom_call.1} parent=1 // pred_fallthru
      _
    // Predicated region
    $region22: #{tpu_custom_call.1} parent=1 // pred_check
      _
    $region23: #{tpu_custom_call.1} parent=1 // pred_check_branch
      %54 = sbr.rel (0) target = $region25
    $region24: #{tpu_custom_call.1} parent=1 // pred_region
      _
    $region25: #{tpu_custom_call.1} parent=1 // pred_fallthru
      _
    // Predicated region
    $region26: #{tpu_custom_call.1} parent=1 // pred_check
      _
    $region27: #{tpu_custom_call.1} parent=1 // pred_check_branch
      %56 = sbr.rel (0) target = $region29
    $region28: #{tpu_custom_call.1} parent=1 // pred_region
      %57 = dma.done [#allocation4], 128
    $region29: #{tpu_custom_call.1} parent=1 // pred_fallthru
      _
    // Predicated region
    $region30: #{tpu_custom_call.1} parent=1 // pred_check
      _
    $region31: #{tpu_custom_call.1} parent=1 // pred_check_branch
      %59 = sbr.rel (0) target = $region33
    $region32: #{tpu_custom_call.1} parent=1 // pred_region
      %60 = dma.done [#allocation7], 2048
    $region33: #{tpu_custom_call.1} parent=1 // pred_fallthru
      _
    // Predicated region
    $region34: #{tpu_custom_call.1} parent=1 // pred_check
      _
    $region35: #{tpu_custom_call.1} parent=1 // pred_check_branch
      %62 = sbr.rel (0) target = $region37
    $region36: #{tpu_custom_call.1} parent=1 // pred_region
      %63 = dma.done [#allocation7], 2048
    $region37: #{tpu_custom_call.1} parent=1 // pred_fallthru
      _
    %v64 = vld [vmem:[#allocation3] sm:$0xff]
    %v65 = vld [vmem:[#allocation6] sm:$0xff]
    %v66 = vld [vmem:[#allocation6 + $0x8] sm:$0xff]
    %v67 = vld [vmem:[#allocation6 + $0x10] sm:$0xff]
    %v68 = vld [vmem:[#allocation6 + $0x18] sm:$0xff]
    %v69 = vld [vmem:[#allocation6 + $0x20] sm:$0xff]
    %v70 = vld [vmem:[#allocation6 + $0x28] sm:$0xff]
    %v71 = vld [vmem:[#allocation6 + $0x30] sm:$0xff]
    %v72 = vld [vmem:[#allocation6 + $0x38] sm:$0xff]
    %v73 = vld [vmem:[#allocation6 + $0x40] sm:$0xff]
    %v74 = vld [vmem:[#allocation6 + $0x48] sm:$0xff]
    %v75 = vld [vmem:[#allocation6 + $0x50] sm:$0xff]
    %v76 = vld [vmem:[#allocation6 + $0x58] sm:$0xff]
    %v77 = vld [vmem:[#allocation6 + $0x60] sm:$0xff]
    %v78 = vld [vmem:[#allocation6 + $0x68] sm:$0xff]
    %v79 = vld [vmem:[#allocation6 + $0x70] sm:$0xff]
    %v80 = vld [vmem:[#allocation6 + $0x78] sm:$0xff]
    %v81 = vld [vmem:[%s2] sm:$0x1]
    %v83 = vlaneseq
    %v84 = vshrl.u32 %v83, 7
    %v85 = vsub.s32 0, %v84
    %v86 = vrot.slane %v81, %v85
    %88 = vmatprep.subr.mxu0 0.0
    %89 = vmatpush1.msra.mxu0 %v65
    %90 = vmatprep.subr.mxu0 0.0
    %91 = vmatpush1.msra.mxu0 %v66
    %92 = vmatprep.subr.mxu0 0.0
    %93 = vmatpush1.msra.mxu0 %v67
    %94 = vmatprep.subr.mxu0 0.0
    %95 = vmatpush1.msra.mxu0 %v68
    %96 = vmatprep.subr.mxu0 0.0
    %97 = vmatpush1.msra.mxu0 %v69
    %98 = vmatprep.subr.mxu0 0.0
    %99 = vmatpush1.msra.mxu0 %v70
    %100 = vmatprep.subr.mxu0 0.0
    %101 = vmatpush1.msra.mxu0 %v71
    %102 = vmatprep.subr.mxu0 0.0
    %103 = vmatpush1.msra.mxu0 %v72
    %104 = vmatprep.subr.mxu0 0.0
    %105 = vmatpush1.msra.mxu0 %v73
    %106 = vmatprep.subr.mxu0 0.0
    %107 = vmatpush1.msra.mxu0 %v74
    %108 = vmatprep.subr.mxu0 0.0
    %109 = vmatpush1.msra.mxu0 %v75
    %110 = vmatprep.subr.mxu0 0.0
    %111 = vmatpush1.msra.mxu0 %v76
    %112 = vmatprep.subr.mxu0 0.0
    %113 = vmatpush1.msra.mxu0 %v77
    %114 = vmatprep.subr.mxu0 0.0
    %115 = vmatpush1.msra.mxu0 %v78
    %116 = vmatprep.subr.mxu0 0.0
    %117 = vmatpush1.msra.mxu0 %v79
    %118 = vmatprep.subr.mxu0 0.0
    %119 = vmatpush1.msra.mxu0 %v80
    %120 = vmatprep.subr.mxu0 0.0
    %121 = vmatpush1.msra.mxu0 0.0
    %122 = vmatprep.subr.mxu0 0.0
    %123 = vmatpush1.msra.mxu0 0.0
    %124 = vmatprep.subr.mxu0 0.0
    %125 = vmatpush1.msra.mxu0 0.0
    %126 = vmatprep.subr.mxu0 0.0
    %127 = vmatpush1.msra.mxu0 0.0
    %128 = vmatprep.subr.mxu0 0.0
    %129 = vmatpush1.msra.mxu0 0.0
    %130 = vmatprep.subr.mxu0 0.0
    %131 = vmatpush1.msra.mxu0 0.0
    %132 = vmatprep.subr.mxu0 0.0
    %133 = vmatpush1.msra.mxu0 0.0
    %134 = vmatprep.subr.mxu0 0.0
    %135 = vmatpush1.msra.mxu0 0.0
    %136 = vmatprep.subr.mxu0 0.0
    %137 = vmatpush1.msra.mxu0 0.0
    %138 = vmatprep.subr.mxu0 0.0
    %139 = vmatpush1.msra.mxu0 0.0
    %140 = vmatprep.subr.mxu0 0.0
    %141 = vmatpush1.msra.mxu0 0.0
    %142 = vmatprep.subr.mxu0 0.0
    %143 = vmatpush1.msra.mxu0 0.0
    %144 = vmatprep.subr.mxu0 0.0
    %145 = vmatpush1.msra.mxu0 0.0
    %146 = vmatprep.subr.mxu0 0.0
    %147 = vmatpush1.msra.mxu0 0.0
    %148 = vmatprep.subr.mxu0 0.0
    %149 = vmatpush1.msra.mxu0 0.0
    %150 = vmatprep.subr.mxu0 0.0
    %151 = vmatpush1.msra.mxu0 0.0
    %152 = vmatprep.mubr.f32.mxu0 0.0
    %153 = vmatmul.mubr.f32.gmra.mrb[0].mxu0 %v64
    %v154 = vpop.f32.mrb[0].mxu0
    %v155 = vadd.f32 %v86, %v154
    %v156 = vpop.f32.mrb[0].mxu0
    %157 = vdwg.mxu0
    %s158 = sld [smem:[#allocation2]]
    %vm159 = vcmp.ge.f32.partialorder %v155, 0.0
    %v160 = vstv %s158
    %v161 = vmul.f32 %v160, %v155
    %v162 = vsel %vm159, %v155, %v161
    %v163 = vld [vmem:[#allocation8] sm:$0xff]
    %v164 = vld [vmem:[#allocation8 + $0x8] sm:$0xff]
    %v165 = vld [vmem:[#allocation8 + $0x10] sm:$0xff]
    %v166 = vld [vmem:[#allocation8 + $0x18] sm:$0xff]
    %v167 = vld [vmem:[#allocation8 + $0x20] sm:$0xff]
    %v168 = vld [vmem:[#allocation8 + $0x28] sm:$0xff]
    %v169 = vld [vmem:[#allocation8 + $0x30] sm:$0xff]
    %v170 = vld [vmem:[#allocation8 + $0x38] sm:$0xff]
    %v171 = vld [vmem:[#allocation8 + $0x40] sm:$0xff]
    %v172 = vld [vmem:[#allocation8 + $0x48] sm:$0xff]
    %v173 = vld [vmem:[#allocation8 + $0x50] sm:$0xff]
    %v174 = vld [vmem:[#allocation8 + $0x58] sm:$0xff]
    %v175 = vld [vmem:[#allocation8 + $0x60] sm:$0xff]
    %v176 = vld [vmem:[#allocation8 + $0x68] sm:$0xff]
    %v177 = vld [vmem:[#allocation8 + $0x70] sm:$0xff]
    %v178 = vld [vmem:[#allocation8 + $0x78] sm:$0xff]
    %v179 = vld [vmem:[%s4] sm:$0x1]
    %v181 = vlaneseq
    %v182 = vshrl.u32 %v181, 7
    %v183 = vsub.s32 0, %v182
    %v184 = vrot.slane %v179, %v183
    %186 = vmatprep.subr.mxu0 0.0
    %187 = vmatpush1.msra.mxu0 %v163
    %188 = vmatprep.subr.mxu0 0.0
    %189 = vmatpush1.msra.mxu0 %v164
    %190 = vmatprep.subr.mxu0 0.0
    %191 = vmatpush1.msra.mxu0 %v165
    %192 = vmatprep.subr.mxu0 0.0
    %193 = vmatpush1.msra.mxu0 %v166
    %194 = vmatprep.subr.mxu0 0.0
    %195 = vmatpush1.msra.mxu0 %v167
    %196 = vmatprep.subr.mxu0 0.0
    %197 = vmatpush1.msra.mxu0 %v168
    %198 = vmatprep.subr.mxu0 0.0
    %199 = vmatpush1.msra.mxu0 %v169
    %200 = vmatprep.subr.mxu0 0.0
    %201 = vmatpush1.msra.mxu0 %v170
    %202 = vmatprep.subr.mxu0 0.0
    %203 = vmatpush1.msra.mxu0 %v171
    %204 = vmatprep.subr.mxu0 0.0
    %205 = vmatpush1.msra.mxu0 %v172
    %206 = vmatprep.subr.mxu0 0.0
    %207 = vmatpush1.msra.mxu0 %v173
    %208 = vmatprep.subr.mxu0 0.0
    %209 = vmatpush1.msra.mxu0 %v174
    %210 = vmatprep.subr.mxu0 0.0
    %211 = vmatpush1.msra.mxu0 %v175
    %212 = vmatprep.subr.mxu0 0.0
    %213 = vmatpush1.msra.mxu0 %v176
    %214 = vmatprep.subr.mxu0 0.0
    %215 = vmatpush1.msra.mxu0 %v177
    %216 = vmatprep.subr.mxu0 0.0
    %217 = vmatpush1.msra.mxu0 %v178
    %218 = vmatprep.subr.mxu0 0.0
    %219 = vmatpush1.msra.mxu0 0.0
    %220 = vmatprep.subr.mxu0 0.0
    %221 = vmatpush1.msra.mxu0 0.0
    %222 = vmatprep.subr.mxu0 0.0
    %223 = vmatpush1.msra.mxu0 0.0
    %224 = vmatprep.subr.mxu0 0.0
    %225 = vmatpush1.msra.mxu0 0.0
    %226 = vmatprep.subr.mxu0 0.0
    %227 = vmatpush1.msra.mxu0 0.0
    %228 = vmatprep.subr.mxu0 0.0
    %229 = vmatpush1.msra.mxu0 0.0
    %230 = vmatprep.subr.mxu0 0.0
    %231 = vmatpush1.msra.mxu0 0.0
    %232 = vmatprep.subr.mxu0 0.0
    %233 = vmatpush1.msra.mxu0 0.0
    %234 = vmatprep.subr.mxu0 0.0
    %235 = vmatpush1.msra.mxu0 0.0
    %236 = vmatprep.subr.mxu0 0.0
    %237 = vmatpush1.msra.mxu0 0.0
    %238 = vmatprep.subr.mxu0 0.0
    %239 = vmatpush1.msra.mxu0 0.0
    %240 = vmatprep.subr.mxu0 0.0
    %241 = vmatpush1.msra.mxu0 0.0
    %242 = vmatprep.subr.mxu0 0.0
    %243 = vmatpush1.msra.mxu0 0.0
    %244 = vmatprep.subr.mxu0 0.0
    %245 = vmatpush1.msra.mxu0 0.0
    %246 = vmatprep.subr.mxu0 0.0
    %247 = vmatpush1.msra.mxu0 0.0
    %248 = vmatprep.subr.mxu0 0.0
    %249 = vmatpush1.msra.mxu0 0.0
    %250 = vmatprep.mubr.f32.mxu0 0.0
    %251 = vmatmul.mubr.f32.gmra.mrb[0].mxu0 %v162
    %v252 = vpop.f32.mrb[0].mxu0
    %v253 = vadd.f32 %v184, %v252
    %v254 = vpop.f32.mrb[0].mxu0
    %255 = vdwg.mxu0
    %v256 = vadd.f32 %v253, %v64
    %257 = vst [vmem:[#allocation9] sm:$0xff] %v256
    // Predicated region
    $region38: #{tpu_custom_call.1} parent=1 // pred_check
      _
    $region39: #{tpu_custom_call.1} parent=1 // pred_check_branch
      %259 = sbr.rel (0) target = $region41
    $region40: #{tpu_custom_call.1} parent=1 // pred_region
      %s261 = ssub.s32 128, 128
      %262 = vsyncadd [#allocation5], %s261
      %s264 = sshll.u32 [#allocation9], 4
      %s265 = int_to_ptr.vmem [resolvable:$true] %s264
      %267 = dma.vmem_to_hbm [thread:$0]  %s265, 128, %s6, [#allocation5]
    $region41: #{tpu_custom_call.1} parent=1 // pred_fallthru
      _
    // Predicated region
    $region42: #{tpu_custom_call.1} parent=1 // pred_check
      _
    $region43: #{tpu_custom_call.1} parent=1 // pred_check_branch
      %269 = sbr.rel (0) target = $region45
    $region44: #{tpu_custom_call.1} parent=1 // pred_region
      %270 = dma.done [#allocation5], 128
    $region45: #{tpu_custom_call.1} parent=1 // pred_fallthru
      _
    %271 = vsyncpa [#allocation4], 1
    %272 = vsyncpa [#allocation7], 1
    %273 = vsyncpa [#allocation5], 1

// kernel: tpu_custom_call.1
$region0: #{tpu_custom_call.1}
  #allocation0 [shape = 'u32[]', space=smem, size = 0x4, offset = 0x4, fixed_abs, tag = 'smem constant byte address 0x4 - core index']
  #allocation1 [shape = 'u32[144,128]{1,0:T(1,128)}', space=vmem, size = 0x12000, scoped, tag = 'internal scratch']
  #allocation2 [shape = 'f32[1]{0:T(128)S(6)}', space=smem, size = 0x200, scoped, tag = 'scoped memory for tpu_custom_call.1']
  %s0 = inlined_call_operand.hbm [shape: f32[8,128], index: 0, kind: input, shape index: {}]
  %s1 = inlined_call_operand.hbm [shape: f32[128,128], index: 1, kind: input, shape index: {}]
  %s2 = inlined_call_operand.vmem [shape: f32[1,128], index: 2, kind: input, shape index: {}]
  %s3 = inlined_call_operand.hbm [shape: f32[128,128], index: 3, kind: input, shape index: {}]
  %s4 = inlined_call_operand.vmem [shape: f32[1,128], index: 4, kind: input, shape index: {}]
  %s5 = inlined_call_operand.<no memory space> [shape: f32[1], index: 5, kind: input, shape index: {}]
  %s6 = inlined_call_operand.hbm [shape: f32[8,128], index: 6, kind: output, shape index: {}]
  %s7 = sld [smem:[#allocation0]]
  $region46: #{tpu_custom_call.1} parent=0
    _
  %s9 = ssub.s32 1, %s7
  %s10 = scalar_select 0, %s9, %s7
  %11 = sst [smem:[#allocation2]] %s5
  $region1: #{tpu_custom_call.1} parent=0
    #allocation3 [shape = 'u8[4096]{0}', space=vmem, size = 0x1000, scoped, tag = 'input window, operand 0, single buffered']
    #allocation4 [shape = 's32[1]{0}', space=sflag, size = 0x4, scoped, tag = 'scoped memory for tpu_custom_call.1']
    #allocation5 [shape = 's32[1]{0}', space=sflag, size = 0x4, scoped, tag = 'scoped memory for tpu_custom_call.1']
    #allocation6 [shape = 'u8[65536]{0}', space=vmem, size = 0x10000, scoped, tag = 'input window, operand 1, single buffered']
    #allocation7 [shape = 's32[1]{0}', space=sflag, size = 0x4, scoped, tag = 'scoped memory for tpu_custom_call.1']
    #allocation8 [shape = 'u8[65536]{0}', space=vmem, size = 0x10000, scoped, tag = 'input window, operand 3, single buffered']
    #allocation9 [shape = 'u8[4096]{0}', space=vmem, size = 0x1000, scoped, tag = 'output window, operand 0, single buffered']
    %12 = vsyncpa [#allocation4], 0
    %13 = vsyncpa [#allocation7], 0
    %14 = vsyncpa [#allocation5], 0
    // Predicated region
    $region2: #{tpu_custom_call.1} parent=1 // pred_check
      _
    $region3: #{tpu_custom_call.1} parent=1 // pred_check_branch
      %16 = sbr.rel (0) target = $region5
    $region4: #{tpu_custom_call.1} parent=1 // pred_region
      %s18 = ssub.s32 128, 128
      %19 = vsyncadd [#allocation4], %s18
      %s21 = sshll.u32 [#allocation3], 4
      %s22 = int_to_ptr.vmem [resolvable:$true] %s21
      %24 = dma.hbm_to_vmem [thread:$0]  %s0, 128, %s22, [#allocation4]
    $region5: #{tpu_custom_call.1} parent=1 // pred_fallthru
      _
    // Predicated region
    $region6: #{tpu_custom_call.1} parent=1 // pred_check
      _
    $region7: #{tpu_custom_call.1} parent=1 // pred_check_branch
      %26 = sbr.rel (0) target = $region9
    $region8: #{tpu_custom_call.1} parent=1 // pred_region
      %s28 = ssub.s32 2048, 2048
      %29 = vsyncadd [#allocation7], %s28
      %s30 = sshll.u32 [#allocation6], 4
      %s31 = int_to_ptr.vmem [resolvable:$true] %s30
      %36 = dma.hbm_to_vmem [thread:$0]  %s1, 2048, %s31, [#allocation7], 128, 128, 8
    $region9: #{tpu_custom_call.1} parent=1 // pred_fallthru
      _
    // Predicated region
    $region10: #{tpu_custom_call.1} parent=1 // pred_check
      _
    $region11: #{tpu_custom_call.1} parent=1 // pred_check_branch
      %38 = sbr.rel (0) target = $region13
    $region12: #{tpu_custom_call.1} parent=1 // pred_region
      _
    $region13: #{tpu_custom_call.1} parent=1 // pred_fallthru
      _
    // Predicated region
    $region14: #{tpu_custom_call.1} parent=1 // pred_check
      _
    $region15: #{tpu_custom_call.1} parent=1 // pred_check_branch
      %40 = sbr.rel (0) target = $region17
    $region16: #{tpu_custom_call.1} parent=1 // pred_region
      %s42 = ssub.s32 2048, 2048
      %43 = vsyncadd [#allocation7], %s42
      %s44 = sshll.u32 [#allocation8], 4
      %s45 = int_to_ptr.vmem [resolvable:$true] %s44
      %50 = dma.hbm_to_vmem [thread:$0]  %s3, 2048, %s45, [#allocation7], 128, 128, 8
    $region17: #{tpu_custom_call.1} parent=1 // pred_fallthru
      _
    // Predicated region
    $region18: #{tpu_custom_call.1} parent=1 // pred_check
      _
    $region19: #{tpu_custom_call.1} parent=1 // pred_check_branch
      %52 = sbr.rel (0) target = $region21
    $region20: #{tpu_custom_call.1} parent=1 // pred_region
      _
    $region21: #{tpu_custom_call.1} parent=1 // pred_fallthru
      _
    // Predicated region
    $region22: #{tpu_custom_call.1} parent=1 // pred_check
      _
    $region23: #{tpu_custom_call.1} parent=1 // pred_check_branch
      %54 = sbr.rel (0) target = $region25
    $region24: #{tpu_custom_call.1} parent=1 // pred_region
      _
    $region25: #{tpu_custom_call.1} parent=1 // pred_fallthru
      _
    // Predicated region
    $region26: #{tpu_custom_call.1} parent=1 // pred_check
      _
    $region27: #{tpu_custom_call.1} parent=1 // pred_check_branch
      %56 = sbr.rel (0) target = $region29
    $region28: #{tpu_custom_call.1} parent=1 // pred_region
      %57 = dma.done [#allocation4], 128
    $region29: #{tpu_custom_call.1} parent=1 // pred_fallthru
      _
    // Predicated region
    $region30: #{tpu_custom_call.1} parent=1 // pred_check
      _
    $region31: #{tpu_custom_call.1} parent=1 // pred_check_branch
      %59 = sbr.rel (0) target = $region33
    $region32: #{tpu_custom_call.1} parent=1 // pred_region
      %60 = dma.done [#allocation7], 2048
    $region33: #{tpu_custom_call.1} parent=1 // pred_fallthru
      _
    // Predicated region
    $region34: #{tpu_custom_call.1} parent=1 // pred_check
      _
    $region35: #{tpu_custom_call.1} parent=1 // pred_check_branch
      %62 = sbr.rel (0) target = $region37
    $region36: #{tpu_custom_call.1} parent=1 // pred_region
      %63 = dma.done [#allocation7], 2048
    $region37: #{tpu_custom_call.1} parent=1 // pred_fallthru
      _
    %v64 = vld [vmem:[#allocation3] sm:$0xff]
    %v65 = vld [vmem:[#allocation6] sm:$0xff]
    %v66 = vld [vmem:[#allocation6 + $0x8] sm:$0xff]
    %v67 = vld [vmem:[#allocation6 + $0x10] sm:$0xff]
    %v68 = vld [vmem:[#allocation6 + $0x18] sm:$0xff]
    %v69 = vld [vmem:[#allocation6 + $0x20] sm:$0xff]
    %v70 = vld [vmem:[#allocation6 + $0x28] sm:$0xff]
    %v71 = vld [vmem:[#allocation6 + $0x30] sm:$0xff]
    %v72 = vld [vmem:[#allocation6 + $0x38] sm:$0xff]
    %v73 = vld [vmem:[#allocation6 + $0x40] sm:$0xff]
    %v74 = vld [vmem:[#allocation6 + $0x48] sm:$0xff]
    %v75 = vld [vmem:[#allocation6 + $0x50] sm:$0xff]
    %v76 = vld [vmem:[#allocation6 + $0x58] sm:$0xff]
    %v77 = vld [vmem:[#allocation6 + $0x60] sm:$0xff]
    %v78 = vld [vmem:[#allocation6 + $0x68] sm:$0xff]
    %v79 = vld [vmem:[#allocation6 + $0x70] sm:$0xff]
    %v80 = vld [vmem:[#allocation6 + $0x78] sm:$0xff]
    %v81 = vld [vmem:[%s2] sm:$0x1]
    %v83 = vlaneseq
    %v84 = vshrl.u32 %v83, 7
    %v85 = vsub.s32 0, %v84
    %v86 = vrot.slane %v81, %v85
    %88 = vmatprep.subr.mxu0 0.0
    %89 = vmatpush1.msra.mxu0 %v65
    %90 = vmatprep.subr.mxu0 0.0
    %91 = vmatpush1.msra.mxu0 %v66
    %92 = vmatprep.subr.mxu0 0.0
    %93 = vmatpush1.msra.mxu0 %v67
    %94 = vmatprep.subr.mxu0 0.0
    %95 = vmatpush1.msra.mxu0 %v68
    %96 = vmatprep.subr.mxu0 0.0
    %97 = vmatpush1.msra.mxu0 %v69
    %98 = vmatprep.subr.mxu0 0.0
    %99 = vmatpush1.msra.mxu0 %v70
    %100 = vmatprep.subr.mxu0 0.0
    %101 = vmatpush1.msra.mxu0 %v71
    %102 = vmatprep.subr.mxu0 0.0
    %103 = vmatpush1.msra.mxu0 %v72
    %104 = vmatprep.subr.mxu0 0.0
    %105 = vmatpush1.msra.mxu0 %v73
    %106 = vmatprep.subr.mxu0 0.0
    %107 = vmatpush1.msra.mxu0 %v74
    %108 = vmatprep.subr.mxu0 0.0
    %109 = vmatpush1.msra.mxu0 %v75
    %110 = vmatprep.subr.mxu0 0.0
    %111 = vmatpush1.msra.mxu0 %v76
    %112 = vmatprep.subr.mxu0 0.0
    %113 = vmatpush1.msra.mxu0 %v77
    %114 = vmatprep.subr.mxu0 0.0
    %115 = vmatpush1.msra.mxu0 %v78
    %116 = vmatprep.subr.mxu0 0.0
    %117 = vmatpush1.msra.mxu0 %v79
    %118 = vmatprep.subr.mxu0 0.0
    %119 = vmatpush1.msra.mxu0 %v80
    %120 = vmatprep.subr.mxu0 0.0
    %121 = vmatpush1.msra.mxu0 0.0
    %122 = vmatprep.subr.mxu0 0.0
    %123 = vmatpush1.msra.mxu0 0.0
    %124 = vmatprep.subr.mxu0 0.0
    %125 = vmatpush1.msra.mxu0 0.0
    %126 = vmatprep.subr.mxu0 0.0
    %127 = vmatpush1.msra.mxu0 0.0
    %128 = vmatprep.subr.mxu0 0.0
    %129 = vmatpush1.msra.mxu0 0.0
    %130 = vmatprep.subr.mxu0 0.0
    %131 = vmatpush1.msra.mxu0 0.0
    %132 = vmatprep.subr.mxu0 0.0
    %133 = vmatpush1.msra.mxu0 0.0
    %134 = vmatprep.subr.mxu0 0.0
    %135 = vmatpush1.msra.mxu0 0.0
    %136 = vmatprep.subr.mxu0 0.0
    %137 = vmatpush1.msra.mxu0 0.0
    %138 = vmatprep.subr.mxu0 0.0
    %139 = vmatpush1.msra.mxu0 0.0
    %140 = vmatprep.subr.mxu0 0.0
    %141 = vmatpush1.msra.mxu0 0.0
    %142 = vmatprep.subr.mxu0 0.0
    %143 = vmatpush1.msra.mxu0 0.0
    %144 = vmatprep.subr.mxu0 0.0
    %145 = vmatpush1.msra.mxu0 0.0
    %146 = vmatprep.subr.mxu0 0.0
    %147 = vmatpush1.msra.mxu0 0.0
    %148 = vmatprep.subr.mxu0 0.0
    %149 = vmatpush1.msra.mxu0 0.0
    %150 = vmatprep.subr.mxu0 0.0
    %151 = vmatpush1.msra.mxu0 0.0
    %152 = vmatprep.mubr.f32.mxu0 0.0
    %153 = vmatmul.mubr.f32.gmra.mrb[0].mxu0 %v64
    %v154 = vpop.f32.mrb[0].mxu0
    %v155 = vadd.f32 %v86, %v154
    %v156 = vpop.f32.mrb[0].mxu0
    %157 = vdwg.mxu0
    %s158 = sld [smem:[#allocation2]]
    %vm159 = vcmp.ge.f32.partialorder %v155, 0.0
    %v160 = vstv %s158
    %v161 = vmul.f32 %v160, %v155
    %v162 = vsel %vm159, %v155, %v161
    %v163 = vld [vmem:[#allocation8] sm:$0xff]
    %v164 = vld [vmem:[#allocation8 + $0x8] sm:$0xff]
    %v165 = vld [vmem:[#allocation8 + $0x10] sm:$0xff]
    %v166 = vld [vmem:[#allocation8 + $0x18] sm:$0xff]
    %v167 = vld [vmem:[#allocation8 + $0x20] sm:$0xff]
    %v168 = vld [vmem:[#allocation8 + $0x28] sm:$0xff]
    %v169 = vld [vmem:[#allocation8 + $0x30] sm:$0xff]
    %v170 = vld [vmem:[#allocation8 + $0x38] sm:$0xff]
    %v171 = vld [vmem:[#allocation8 + $0x40] sm:$0xff]
    %v172 = vld [vmem:[#allocation8 + $0x48] sm:$0xff]
    %v173 = vld [vmem:[#allocation8 + $0x50] sm:$0xff]
    %v174 = vld [vmem:[#allocation8 + $0x58] sm:$0xff]
    %v175 = vld [vmem:[#allocation8 + $0x60] sm:$0xff]
    %v176 = vld [vmem:[#allocation8 + $0x68] sm:$0xff]
    %v177 = vld [vmem:[#allocation8 + $0x70] sm:$0xff]
    %v178 = vld [vmem:[#allocation8 + $0x78] sm:$0xff]
    %v179 = vld [vmem:[%s4] sm:$0x1]
    %v181 = vlaneseq
    %v182 = vshrl.u32 %v181, 7
    %v183 = vsub.s32 0, %v182
    %v184 = vrot.slane %v179, %v183
    %186 = vmatprep.subr.mxu0 0.0
    %187 = vmatpush1.msra.mxu0 %v163
    %188 = vmatprep.subr.mxu0 0.0
    %189 = vmatpush1.msra.mxu0 %v164
    %190 = vmatprep.subr.mxu0 0.0
    %191 = vmatpush1.msra.mxu0 %v165
    %192 = vmatprep.subr.mxu0 0.0
    %193 = vmatpush1.msra.mxu0 %v166
    %194 = vmatprep.subr.mxu0 0.0
    %195 = vmatpush1.msra.mxu0 %v167
    %196 = vmatprep.subr.mxu0 0.0
    %197 = vmatpush1.msra.mxu0 %v168
    %198 = vmatprep.subr.mxu0 0.0
    %199 = vmatpush1.msra.mxu0 %v169
    %200 = vmatprep.subr.mxu0 0.0
    %201 = vmatpush1.msra.mxu0 %v170
    %202 = vmatprep.subr.mxu0 0.0
    %203 = vmatpush1.msra.mxu0 %v171
    %204 = vmatprep.subr.mxu0 0.0
    %205 = vmatpush1.msra.mxu0 %v172
    %206 = vmatprep.subr.mxu0 0.0
    %207 = vmatpush1.msra.mxu0 %v173
    %208 = vmatprep.subr.mxu0 0.0
    %209 = vmatpush1.msra.mxu0 %v174
    %210 = vmatprep.subr.mxu0 0.0
    %211 = vmatpush1.msra.mxu0 %v175
    %212 = vmatprep.subr.mxu0 0.0
    %213 = vmatpush1.msra.mxu0 %v176
    %214 = vmatprep.subr.mxu0 0.0
    %215 = vmatpush1.msra.mxu0 %v177
    %216 = vmatprep.subr.mxu0 0.0
    %217 = vmatpush1.msra.mxu0 %v178
    %218 = vmatprep.subr.mxu0 0.0
    %219 = vmatpush1.msra.mxu0 0.0
    %220 = vmatprep.subr.mxu0 0.0
    %221 = vmatpush1.msra.mxu0 0.0
    %222 = vmatprep.subr.mxu0 0.0
    %223 = vmatpush1.msra.mxu0 0.0
    %224 = vmatprep.subr.mxu0 0.0
    %225 = vmatpush1.msra.mxu0 0.0
    %226 = vmatprep.subr.mxu0 0.0
    %227 = vmatpush1.msra.mxu0 0.0
    %228 = vmatprep.subr.mxu0 0.0
    %229 = vmatpush1.msra.mxu0 0.0
    %230 = vmatprep.subr.mxu0 0.0
    %231 = vmatpush1.msra.mxu0 0.0
    %232 = vmatprep.subr.mxu0 0.0
    %233 = vmatpush1.msra.mxu0 0.0
    %234 = vmatprep.subr.mxu0 0.0
    %235 = vmatpush1.msra.mxu0 0.0
    %236 = vmatprep.subr.mxu0 0.0
    %237 = vmatpush1.msra.mxu0 0.0
    %238 = vmatprep.subr.mxu0 0.0
    %239 = vmatpush1.msra.mxu0 0.0
    %240 = vmatprep.subr.mxu0 0.0
    %241 = vmatpush1.msra.mxu0 0.0
    %242 = vmatprep.subr.mxu0 0.0
    %243 = vmatpush1.msra.mxu0 0.0
    %244 = vmatprep.subr.mxu0 0.0
    %245 = vmatpush1.msra.mxu0 0.0
    %246 = vmatprep.subr.mxu0 0.0
    %247 = vmatpush1.msra.mxu0 0.0
    %248 = vmatprep.subr.mxu0 0.0
    %249 = vmatpush1.msra.mxu0 0.0
    %250 = vmatprep.mubr.f32.mxu0 0.0
    %251 = vmatmul.mubr.f32.gmra.mrb[0].mxu0 %v162
    %v252 = vpop.f32.mrb[0].mxu0
    %v253 = vadd.f32 %v184, %v252
    %v254 = vpop.f32.mrb[0].mxu0
    %255 = vdwg.mxu0
    %v256 = vadd.f32 %v253, %v64
    %257 = vst [vmem:[#allocation9] sm:$0xff] %v256
    // Predicated region
    $region38: #{tpu_custom_call.1} parent=1 // pred_check
      _
    $region39: #{tpu_custom_call.1} parent=1 // pred_check_branch
      %259 = sbr.rel (0) target = $region41
    $region40: #{tpu_custom_call.1} parent=1 // pred_region
      %s261 = ssub.s32 128, 128
      %262 = vsyncadd [#allocation5], %s261
      %s264 = sshll.u32 [#allocation9], 4
      %s265 = int_to_ptr.vmem [resolvable:$true] %s264
      %267 = dma.vmem_to_hbm [thread:$0]  %s265, 128, %s6, [#allocation5]
    $region41: #{tpu_custom_call.1} parent=1 // pred_fallthru
      _
    // Predicated region
    $region42: #{tpu_custom_call.1} parent=1 // pred_check
      _
    $region43: #{tpu_custom_call.1} parent=1 // pred_check_branch
      %269 = sbr.rel (0) target = $region45
    $region44: #{tpu_custom_call.1} parent=1 // pred_region
      %270 = dma.done [#allocation5], 128
    $region45: #{tpu_custom_call.1} parent=1 // pred_fallthru
      _
    %271 = vsyncpa [#allocation4], 1
    %272 = vsyncpa [#allocation7], 1
    %273 = vsyncpa [#allocation5], 1

</llo_original>
